<compile_context>
chip_gen: v6e
topology: v6e:2x2x1
jax: 0.10.0
libtpu: 0.0.40
codegen_flags: <defaults>
</compile_context>

<pallas_src>
import math
import functools

import jax
import jax.numpy as jnp
from jax.experimental import pallas as pl
from jax.experimental.pallas import tpu as pltpu

MAX_TM = 512                      # lane tile for the big early layers
VMEM_LIMIT = 48 * 1024 * 1024     # explicit budget: headroom even on v7x (64 MiB)


def _pick_tile(m, max_tile=MAX_TM):
    """Per-call lane-tile: big tiles for big M, a single full tile for tiny M."""
    if m >= max_tile:
        return max_tile, pl.cdiv(m, max_tile) * max_tile
    if m > 128:
        mp = pl.cdiv(m, 128) * 128
        return mp, mp
    return m, m                    # tiny late layers: one unpadded tile


# ----------------------------- Pallas kernels ------------------------------

def _apply_act(y, act):
    if act == "relu":
        return jnp.maximum(y, 0.0)
    if act == "elu":
        return jnp.where(y > 0.0, y, jnp.expm1(y))
    return y


def _fused_mm_kernel(w_ref, x_ref, s_ref, b_ref, o_ref, *, act):
    # bf16 MXU GEMM, f32 accumulate + BN + activation epilogue.
    y = jnp.dot(w_ref[...], x_ref[...], preferred_element_type=jnp.float32)
    y = y * s_ref[...] + b_ref[...]
    o_ref[...] = _apply_act(y, act).astype(o_ref.dtype)


def _fused_mm_res_kernel(w_ref, x_ref, s_ref, b_ref, r_ref, o_ref, *, act):
    y = jnp.dot(w_ref[...], x_ref[...], preferred_element_type=jnp.float32)
    y = y * s_ref[...] + b_ref[...] + r_ref[...].astype(jnp.float32)
    o_ref[...] = _apply_act(y, act).astype(o_ref.dtype)


def _max4_kernel(a_ref, b_ref, c_ref, d_ref, o_ref):
    o_ref[...] = jnp.maximum(jnp.maximum(a_ref[...], b_ref[...]),
                             jnp.maximum(c_ref[...], d_ref[...]))


def _tail_kernel(x_ref, w_ref, o_ref):
    # Fused AdaptiveAvgPool((T,1,1)) + 1x1x1 fc conv: mean over (H*W), dot over C.
    x = x_ref[...].astype(jnp.float32)          # (C, B*T, H*W)
    m = jnp.mean(x, axis=2)                     # (C, B*T)
    o_ref[...] = jnp.dot(w_ref[...], m, preferred_element_type=jnp.float32)


# ----------------------------- Pallas wrappers ------------------------------

def fused_matmul(w, x, scale, bias, residual=None, act="none"):
    """act((w @ x) * scale + bias (+ residual)); w:(N,K), x:(K,M) -> (N,M).

    Weights-stationary, lane-dense output tiles (N, TM); bf16 GEMM inputs,
    f32 epilogue, bf16 output."""
    N, K = w.shape
    M = x.shape[1]
    TM, Mp = _pick_tile(M)
    wb = w.astype(jnp.bfloat16)
    xb = x.astype(jnp.bfloat16)
    if Mp != M:
        xb = jnp.pad(xb, ((0, 0), (0, Mp - M)))
    s2 = scale.reshape(N, 1).astype(jnp.float32)
    b2 = bias.reshape(N, 1).astype(jnp.float32)

    in_specs = [
        pl.BlockSpec((N, K), lambda i: (0, 0)),
        pl.BlockSpec((K, TM), lambda i: (0, i)),
        pl.BlockSpec((N, 1), lambda i: (0, 0)),
        pl.BlockSpec((N, 1), lambda i: (0, 0)),
    ]
    args = [wb, xb, s2, b2]
    if residual is None:
        kernel = functools.partial(_fused_mm_kernel, act=act)
    else:
        rb = residual.astype(jnp.bfloat16)
        if Mp != M:
            rb = jnp.pad(rb, ((0, 0), (0, Mp - M)))
        in_specs.append(pl.BlockSpec((N, TM), lambda i: (0, i)))
        args.append(rb)
        kernel = functools.partial(_fused_mm_res_kernel, act=act)

    out = pl.pallas_call(
        kernel,
        out_shape=jax.ShapeDtypeStruct((N, Mp), jnp.bfloat16),
        grid=(Mp // TM,),
        in_specs=in_specs,
        out_specs=pl.BlockSpec((N, TM), lambda i: (0, i)),
        compiler_params=pltpu.CompilerParams(
            dimension_semantics=("parallel",),
            vmem_limit_bytes=VMEM_LIMIT),
    )(*args)
    return out[:, :M] if Mp != M else out


def im2col3d(x, ksize, stride, pad):
    """x: (C, B, T, H, W) -> patches (kT*kH*kW*C, B*To*Ho*Wo)  (XLA glue)."""
    C, B, T, H, W = x.shape
    kT, kH, kW = ksize
    sT, sH, sW = stride
    pT, pH, pW = pad
    xp = jnp.pad(x, ((0, 0), (0, 0), (pT, pT), (pH, pH), (pW, pW)))
    To = (T + 2 * pT - kT) // sT + 1
    Ho = (H + 2 * pH - kH) // sH + 1
    Wo = (W + 2 * pW - kW) // sW + 1
    taps = []
    for dt in range(kT):
        for dh in range(kH):
            for dw in range(kW):
                taps.append(xp[:, :, dt:dt + To * sT:sT,
                               dh:dh + Ho * sH:sH,
                               dw:dw + Wo * sW:sW])
    patches = jnp.stack(taps, axis=0)                 # (taps, C, B, To, Ho, Wo)
    K = kT * kH * kW * C
    return patches.reshape(K, B * To * Ho * Wo), (B, To, Ho, Wo)


def conv3d_bn_act(x, w, scale, bias, stride, pad, residual=None, act="none"):
    """Conv3d (bias=False, PyTorch weight (Cout,Cin,kT,kH,kW)) fused with BN,
    optional residual add and activation.  x: (C, B, T, H, W) channels-first."""
    Cout, Cin, kT, kH, kW = w.shape
    patches, (B, To, Ho, Wo) = im2col3d(x, (kT, kH, kW), stride, pad)
    # K ordering = tap-major, channel-minor (matches im2col stacking order).
    wmat = jnp.transpose(w, (0, 2, 3, 4, 1)).reshape(Cout, kT * kH * kW * Cin)
    res2 = residual.reshape(Cout, -1) if residual is not None else None
    out = fused_matmul(wmat, patches, scale, bias, residual=res2, act=act)
    return out.reshape(Cout, B, To, Ho, Wo)


def maxpool_s2(x):
    """MaxPool3d kernel (1,2,2) stride (1,2,2) on (C, B, T, H, W)."""
    C, B, T, H, W = x.shape
    Ho, Wo = H // 2, W // 2
    M = B * T * Ho * Wo

    def sl(dh, dw):
        return x[:, :, :, dh:dh + 2 * Ho:2, dw:dw + 2 * Wo:2].reshape(C, M)

    a, b, c, d = sl(0, 0), sl(0, 1), sl(1, 0), sl(1, 1)
    TM, Mp = _pick_tile(M)
    pads = (lambda z: jnp.pad(z, ((0, 0), (0, Mp - M)))) if Mp != M else (lambda z: z)
    out = pl.pallas_call(
        _max4_kernel,
        out_shape=jax.ShapeDtypeStruct((C, Mp), x.dtype),
        grid=(Mp // TM,),
        in_specs=[pl.BlockSpec((C, TM), lambda i: (0, i)) for _ in range(4)],
        out_specs=pl.BlockSpec((C, TM), lambda i: (0, i)),
        compiler_params=pltpu.CompilerParams(
            dimension_semantics=("parallel",),
            vmem_limit_bytes=VMEM_LIMIT),
    )(pads(a), pads(b), pads(c), pads(d))
    out = out[:, :M] if Mp != M else out
    return out.reshape(C, B, T, Ho, Wo)


def conv_transpose_temporal(x, w, conv_bias, bn_scale, bn_bias, act="elu"):
    """ConvTranspose3d kernel (4,1,1), stride (2,1,1), padding (1,0,0) + BN + act.

    Polyphase decomposition (no zero-stuffed input):
       y[2i]   = w[:, :, 1]^T x[i] + w[:, :, 3]^T x[i-1]
       y[2i+1] = w[:, :, 2]^T x[i] + w[:, :, 0]^T x[i+1]
    -> one stride-1 temporal conv over taps (x[i-1], x[i], x[i+1]) producing
       2*Cout channels (even block, odd block), then frame interleave."""
    C, B, T, H, W = x.shape
    Cin, Cout = w.shape[0], w.shape[1]
    wt = w[:, :, :, 0, 0]                                 # (Cin, Cout, 4)
    zeros = jnp.zeros((Cout, Cin), jnp.float32)
    w_even = jnp.concatenate([wt[:, :, 3].T, wt[:, :, 1].T, zeros], axis=1)
    w_odd = jnp.concatenate([zeros, wt[:, :, 2].T, wt[:, :, 0].T], axis=1)
    wmat = jnp.concatenate([w_even, w_odd], axis=0)       # (2*Cout, 3*Cin)

    eff_bias = bn_bias + conv_bias * bn_scale             # fold conv bias thru BN
    scale2 = jnp.concatenate([bn_scale, bn_scale])
    bias2 = jnp.concatenate([eff_bias, eff_bias])

    patches, _ = im2col3d(x, (3, 1, 1), (1, 1, 1), (1, 0, 0))
    out = fused_matmul(wmat, patches, scale2, bias2, act=act)   # (2*Cout, B*T*H*W)
    out = out.reshape(2, Cout, B, T, H, W)
    out = jnp.transpose(out, (1, 2, 3, 0, 4, 5)).reshape(Cout, B, 2 * T, H, W)
    return out


def tail_avgpool_fc(x, fc_w):
    """Fused AdaptiveAvgPool3d((T,1,1)) + 1x1x1 fc conv (C->1, bias=False)."""
    C, B, T, H, W = x.shape
    x3 = x.reshape(C, B * T, H * W)
    wmat = fc_w.reshape(1, C).astype(jnp.float32)
    out = pl.pallas_call(
        _tail_kernel,
        out_shape=jax.ShapeDtypeStruct((1, B * T), jnp.float32),
        grid=(1,),
        in_specs=[pl.BlockSpec((C, B * T, H * W), lambda i: (0, 0, 0)),
                  pl.BlockSpec((1, C), lambda i: (0, 0))],
        out_specs=pl.BlockSpec((1, B * T), lambda i: (0, 0)),
        compiler_params=pltpu.CompilerParams(vmem_limit_bytes=VMEM_LIMIT),
    )(x3, wmat)
    return out.reshape(B, T)


# ----------------------------- parameters ------------------------------

def bn_params(c, eps=1e-5):
    gamma = jnp.ones((c,), jnp.float32)
    beta = jnp.zeros((c,), jnp.float32)
    mean = jnp.zeros((c,), jnp.float32)
    var = jnp.ones((c,), jnp.float32)
    scale = gamma / jnp.sqrt(var + eps)
    bias = beta - mean * scale
    return scale, bias


def kaiming_normal(key, shape):
    # fan_out mode for Conv3d weight (Cout, Cin, kT, kH, kW)
    fan_out = shape[0] * shape[2] * shape[3] * shape[4]
    std = math.sqrt(2.0 / fan_out)
    return std * jax.random.normal(key, shape, dtype=jnp.float32)


def init_params(key, block_inplanes=(8, 16, 32, 32), layers=(1, 1, 1, 1),
                n_input_channels=3, conv1_t_size=1):
    keys = iter(jax.random.split(key, 64))
    params = {"conv1_t_size": conv1_t_size}
    in_planes = block_inplanes[0]
    params["conv1_w"] = kaiming_normal(
        next(keys), (in_planes, n_input_channels, conv1_t_size, 5, 5))
    params["bn1"] = bn_params(in_planes)

    def make_layer(planes, blocks, stride):
        nonlocal in_planes
        blocks_p = []
        for bi in range(blocks):
            s = stride if bi == 0 else 1
            bp = {"stride": s}
            bp["conv1_w"] = kaiming_normal(next(keys), (planes, in_planes, 3, 3, 3))
            bp["bn1_scale"], bp["bn1_bias"] = bn_params(planes)
            bp["conv2_w"] = kaiming_normal(next(keys), (planes, planes, 3, 3, 3))
            bp["bn2_scale"], bp["bn2_bias"] = bn_params(planes)
            if s != 1 or in_planes != planes:            # shortcut_type 'B'
                bp["down_w"] = kaiming_normal(next(keys), (planes, in_planes, 1, 1, 1))
                bp["down_scale"], bp["down_bias"] = bn_params(planes)
            else:
                bp["down_w"] = bp["down_scale"] = bp["down_bias"] = None
            in_planes = planes
            blocks_p.append(bp)
        return blocks_p

    params["layer1"] = make_layer(block_inplanes[0], layers[0], 1)
    params["layer2"] = make_layer(block_inplanes[1], layers[1], 2)
    params["layer3"] = make_layer(block_inplanes[2], layers[2], 2)
    params["layer4"] = make_layer(block_inplanes[3], layers[3], 1)

    c = block_inplanes[3]
    up = []
    for _ in range(2):
        # PyTorch ConvTranspose3d weight layout: (Cin, Cout, kT, kH, kW)
        w = 0.05 * jax.random.normal(next(keys), (c, c, 4, 1, 1), jnp.float32)
        b = 0.05 * jax.random.normal(next(keys), (c,), jnp.float32)
        s, bb = bn_params(c)
        up.append({"w": w, "b": b, "bn_scale": s, "bn_bias": bb})
    params["upsample"] = up
    params["fc_w"] = kaiming_normal(next(keys), (1, c, 1, 1, 1))
    return params


# ----------------------------- forward ------------------------------

def basic_block(x, p):
    s = p["stride"]
    out = conv3d_bn_act(x, p["conv1_w"], p["bn1_scale"], p["bn1_bias"],
                        (s, s, s), (1, 1, 1), act="relu")
    if p["down_w"] is not None:
        residual = conv3d_bn_act(x, p["down_w"], p["down_scale"], p["down_bias"],
                                 (s, s, s), (0, 0, 0), act="none")
    else:
        residual = x
    out = conv3d_bn_act(out, p["conv2_w"], p["bn2_scale"], p["bn2_bias"],
                        (1, 1, 1), (1, 1, 1), residual=residual, act="relu")
    return out


def resnet3d_forward(params, inputs):
    x = inputs["input_clip"]                 # (B, C, T, H, W) like PyTorch
    # torch.diff(x, n=1, dim=2, prepend=x[:, :, 0:1]) : first frame -> 0
    x = x - jnp.concatenate([x[:, :, :1], x[:, :, :-1]], axis=2)
    # channels-first internal layout (C, B, T, H, W), activations in bf16
    x = jnp.transpose(x, (1, 0, 2, 3, 4)).astype(jnp.bfloat16)

    tpad = params["conv1_t_size"] // 2
    x = conv3d_bn_act(x, params["conv1_w"], params["bn1"][0], params["bn1"][1],
                      stride=(1, 2, 2), pad=(tpad, 2, 2), act="relu")
    x = maxpool_s2(x)
    for layer in ("layer1", "layer2", "layer3", "layer4"):
        for bp in params[layer]:
            x = basic_block(x, bp)
    for up in params["upsample"]:
        x = conv_transpose_temporal(x, up["w"], up["b"],
                                    up["bn_scale"], up["bn_bias"], act="elu")
    rppg = tail_avgpool_fc(x, params["fc_w"])     # (B, T)
    return {"rPPG": rppg}


# ----------------------------- main ------------------------------

if __name__ == "__main__":
    key = jax.random.PRNGKey(0)
    pkey, xkey = jax.random.split(key)
    B, Cin, T, H, W = 2, 3, 8, 32, 32        # num_frames == T == 8
    params = init_params(pkey)
    x = jax.random.normal(xkey, (B, Cin, T, H, W), jnp.float32)
    out = resnet3d_forward(params, {"input_clip": x})
    rppg = jax.block_until_ready(out["rPPG"])
    assert rppg.shape == (B, T), rppg.shape
    assert bool(jnp.all(jnp.isfinite(rppg)))
    print("KERNEL_OK")
</pallas_src>

<mosaic_0001>
module attributes {stable_mosaic.version = 11 : i64} {
  func.func @_fused_mm_kernel(%arg0: i32, %arg1: memref<8x75xbf16, #tpu.memory_space<vmem>>, %arg2: memref<75x512xbf16, #tpu.memory_space<vmem>>, %arg3: memref<8x1xf32, #tpu.memory_space<vmem>>, %arg4: memref<8x1xf32, #tpu.memory_space<vmem>>, %arg5: memref<8x512xbf16, #tpu.memory_space<vmem>>) attributes {dimension_semantics = [#tpu.dimension_semantics<parallel>], iteration_bounds = array<i64: 8>, scalar_prefetch = 0 : i64, scratch_operands = 0 : i64, tpu.core_type = #tpu.core_type<tc>, window_params = [{pipeline_mode = #tpu.pipeline_mode<synchronous>, transform_indices = @transform_0, window_bounds = array<i64: 8, 75>}, {transform_indices = @transform_1, window_bounds = array<i64: 75, 512>}, {pipeline_mode = #tpu.pipeline_mode<synchronous>, transform_indices = @transform_2, window_bounds = array<i64: 8, 1>}, {pipeline_mode = #tpu.pipeline_mode<synchronous>, transform_indices = @transform_3, window_bounds = array<i64: 8, 1>}, {transform_indices = @transform_4, window_bounds = array<i64: 8, 512>}]} {
    %c0 = arith.constant 0 : index
    %c0_0 = arith.constant 0 : index
    %0 = vector.load %arg1[%c0, %c0_0] : memref<8x75xbf16, #tpu.memory_space<vmem>>, vector<8x75xbf16>
    %c0_1 = arith.constant 0 : index
    %c0_2 = arith.constant 0 : index
    %1 = vector.load %arg2[%c0_1, %c0_2] : memref<75x512xbf16, #tpu.memory_space<vmem>>, vector<75x512xbf16>
    %cst = arith.constant dense<0.000000e+00> : vector<8x512xf32>
    %2 = tpu.matmul %0, %1, %cst {dimension_numbers = #tpu.dot_dimension_numbers<[1], [0], [0], [1], [0, 0, 1, 1], [], []>} : vector<8x75xbf16>, vector<75x512xbf16>, vector<8x512xf32> -> vector<8x512xf32>
    %c0_3 = arith.constant 0 : index
    %c0_4 = arith.constant 0 : index
    %3 = vector.load %arg3[%c0_3, %c0_4] : memref<8x1xf32, #tpu.memory_space<vmem>>, vector<8x1xf32>
    %4 = vector.broadcast %3 : vector<8x1xf32> to vector<8x512xf32>
    %5 = arith.mulf %2, %4 : vector<8x512xf32>
    %c0_5 = arith.constant 0 : index
    %c0_6 = arith.constant 0 : index
    %6 = vector.load %arg4[%c0_5, %c0_6] : memref<8x1xf32, #tpu.memory_space<vmem>>, vector<8x1xf32>
    %7 = vector.broadcast %6 : vector<8x1xf32> to vector<8x512xf32>
    %8 = arith.addf %5, %7 : vector<8x512xf32>
    %cst_7 = arith.constant 0.000000e+00 : f32
    %9 = vector.broadcast %cst_7 : f32 to vector<8x512xf32>
    %10 = arith.maximumf %8, %9 : vector<8x512xf32>
    %11 = arith.truncf %10 : vector<8x512xf32> to vector<8x512xbf16>
    %c0_8 = arith.constant 0 : index
    %c0_9 = arith.constant 0 : index
    %12 = vector.load %arg5[%c0_8, %c0_9] : memref<8x512xbf16, #tpu.memory_space<vmem>>, vector<8x512xbf16>
    tpu.vector_store %arg5[%c0_8, %c0_9], %11 {strides = array<i32>} : memref<8x512xbf16, #tpu.memory_space<vmem>>, vector<8x512xbf16>,
    return
  }
  func.func @transform_0(%arg0: i32) -> (i32, i32) {
    %c0_i32 = arith.constant 0 : i32
    %c0_i32_0 = arith.constant 0 : i32
    %c0_i32_1 = arith.constant 0 : i32
    return %c0_i32, %c0_i32_0 : i32, i32
  }
  func.func @transform_1(%arg0: i32) -> (i32, i32) {
    %c0_i32 = arith.constant 0 : i32
    %c0_i32_0 = arith.constant 0 : i32
    return %c0_i32, %arg0 : i32, i32
  }
  func.func @transform_2(%arg0: i32) -> (i32, i32) {
    %c0_i32 = arith.constant 0 : i32
    %c0_i32_0 = arith.constant 0 : i32
    %c0_i32_1 = arith.constant 0 : i32
    return %c0_i32, %c0_i32_0 : i32, i32
  }
  func.func @transform_3(%arg0: i32) -> (i32, i32) {
    %c0_i32 = arith.constant 0 : i32
    %c0_i32_0 = arith.constant 0 : i32
    %c0_i32_1 = arith.constant 0 : i32
    return %c0_i32, %c0_i32_0 : i32, i32
  }
  func.func @transform_4(%arg0: i32) -> (i32, i32) {
    %c0_i32 = arith.constant 0 : i32
    %c0_i32_0 = arith.constant 0 : i32
    return %c0_i32, %arg0 : i32, i32
  }
}

</mosaic_0001>

<llo_original>
// kernel: tpu_custom_call.1
$region0: #{tpu_custom_call.1}
  #allocation0 [shape = 'u32[]', space=smem, size = 0x4, offset = 0x4, fixed_abs, tag = 'smem constant byte address 0x4 - core index']
  #allocation1 [shape = 'u32[144,128]{1,0:T(1,128)}', space=vmem, size = 0x12000, scoped, tag = 'internal scratch']
  %s0 = inlined_call_operand.vmem [shape: bf16[8,75], index: 0, kind: input, shape index: {}]
  %s1 = inlined_call_operand.hbm [shape: bf16[75,4096], index: 1, kind: input, shape index: {}]
  %s2 = inlined_call_operand.vmem [shape: f32[8,1], index: 2, kind: input, shape index: {}]
  %s3 = inlined_call_operand.vmem [shape: f32[8,1], index: 3, kind: input, shape index: {}]
  %s4 = inlined_call_operand.hbm [shape: bf16[8,4096], index: 4, kind: output, shape index: {}]
  %s5 = sld [smem:[#allocation0]]
  $region53: #{tpu_custom_call.1} parent=0
    _
  %s7 = ssub.s32 1, %s5
  %s8 = scalar_select 0, %s7, %s5
  $region1: #{tpu_custom_call.1} parent=0
    #allocation2 [shape = 'u8[163840]{0}', space=vmem, size = 0x28000, scoped, tag = 'input window, operand 1']
    #allocation3 [shape = 's32[2]{0}', space=sflag, size = 0x8, scoped, tag = 'scoped memory for tpu_custom_call.1']
    #allocation4 [shape = 's32[2]{0}', space=sflag, size = 0x8, scoped, tag = 'scoped memory for tpu_custom_call.1']
    #allocation5 [shape = 'u8[16384]{0}', space=vmem, size = 0x4000, scoped, tag = 'output window, operand 0']
    %9 = vsyncpa [#allocation3], 0
    %s10 = scalar_lea.sflag [#allocation3], 1
    %11 = vsyncpa %s10, 0
    %12 = vsyncpa [#allocation4], 0
    %s13 = scalar_lea.sflag [#allocation4], 1
    %14 = vsyncpa %s13, 0
    loop: start=0, step=1, limit=10
    $region2: #{tpu_custom_call.1} parent=1 // loop_pre_header
      _
    $region3: #{tpu_custom_call.1} parent=1 // loop_header
      %s16 = sphi 0, %s20
      %p17 = scmp.ge.s32.totalorder %s16, 10
      %s24 = sphi 0, %s24
      %s26 = sphi 0, %s24
      %s27 = sphi 0, %s26
      %s41 = sphi 0, %s27
      %s47 = sphi 0, %s49
      %s50 = sphi 0, %s47
      %s51 = sphi 0, %s50
      %s67 = sphi 0, %s51
      %s71 = sphi 0, %s71
      %s73 = sphi 0, %s71
      %s74 = sphi 0, %s73
      %s88 = sphi 0, %s74
      %s92 = sphi 0, %s92
      %s94 = sphi 0, %s92
      %s95 = sphi 0, %s94
      %s109 = sphi 0, %s95
      %s115 = sphi 0, %s117
      %s118 = sphi 0, %s115
      %s119 = sphi 0, %s118
      %s135 = sphi 0, %s119
    $region4: #{tpu_custom_call.1} parent=1 // loop_header_branch
      %19 = sbr.rel (%p17) target = $region8
    $region5: #{tpu_custom_call.1} parent=1 // loop_body
      %s21 = ssub.s32 %s16, 1
      %s22 = ssub.s32 %s16, 2
      %s23 = sadd.s32 %s16, 1
      %s25 = sadd.s32 %s24, 1
      %p28 = scmp.eq.s32.totalorder %s16, 7
      %p29 = scmp.ne.s32.totalorder %s24, %s26
      %p30 = scmp.eq.s32.totalorder %s16, 0
      %p31 = por %p29, %p30
      %p32 = scmp.ne.s32.totalorder %s24, %s26
      %p33 = scmp.eq.s32.totalorder %s21, 7
      %p34 = por %p32, %p33
      %p35 = scmp.ne.s32.totalorder %s26, %s27
      %p36 = scmp.eq.s32.totalorder %s21, 0
      %p37 = por %p35, %p36
      %p38 = scmp.ne.s32.totalorder %s26, %s27
      %p39 = scmp.eq.s32.totalorder %s22, 7
      %p40 = por %p38, %p39
      %p42 = scmp.ne.s32.totalorder %s27, %s41
      %p43 = scmp.eq.s32.totalorder %s22, 0
      %p44 = por %p42, %p43
      %s45 = ssub.s32 %s16, %s23
      %p46 = scmp.eq.s32.totalorder %s45, 0
      %s48 = sadd.s32 %s47, 1
      %s49 = scalar_select %p46, %s47, %s48
      %p52 = pneg %p46
      %p53 = scmp.eq.s32.totalorder %s16, 7
      %p54 = por %p52, %p53
      %p55 = scmp.ne.s32.totalorder %s47, %s50
      %p56 = scmp.eq.s32.totalorder %s16, 0
      %p57 = por %p55, %p56
      %p58 = scmp.ne.s32.totalorder %s47, %s50
      %p59 = scmp.eq.s32.totalorder %s21, 7
      %p60 = por %p58, %p59
      %p61 = scmp.ne.s32.totalorder %s50, %s51
      %p62 = scmp.eq.s32.totalorder %s21, 0
      %p63 = por %p61, %p62
      %p64 = scmp.ne.s32.totalorder %s50, %s51
      %p65 = scmp.eq.s32.totalorder %s22, 7
      %p66 = por %p64, %p65
      %p68 = scmp.ne.s32.totalorder %s51, %s67
      %p69 = scmp.eq.s32.totalorder %s22, 0
      %p70 = por %p68, %p69
      %s72 = sadd.s32 %s71, 1
      %p75 = scmp.eq.s32.totalorder %s16, 7
      %p76 = scmp.ne.s32.totalorder %s71, %s73
      %p77 = scmp.eq.s32.totalorder %s16, 0
      %p78 = por %p76, %p77
      %p79 = scmp.ne.s32.totalorder %s71, %s73
      %p80 = scmp.eq.s32.totalorder %s21, 7
      %p81 = por %p79, %p80
      %p82 = scmp.ne.s32.totalorder %s73, %s74
      %p83 = scmp.eq.s32.totalorder %s21, 0
      %p84 = por %p82, %p83
      %p85 = scmp.ne.s32.totalorder %s73, %s74
      %p86 = scmp.eq.s32.totalorder %s22, 7
      %p87 = por %p85, %p86
      %p89 = scmp.ne.s32.totalorder %s74, %s88
      %p90 = scmp.eq.s32.totalorder %s22, 0
      %p91 = por %p89, %p90
      %s93 = sadd.s32 %s92, 1
      %p96 = scmp.eq.s32.totalorder %s16, 7
      %p97 = scmp.ne.s32.totalorder %s92, %s94
      %p98 = scmp.eq.s32.totalorder %s16, 0
      %p99 = por %p97, %p98
      %p100 = scmp.ne.s32.totalorder %s92, %s94
      %p101 = scmp.eq.s32.totalorder %s21, 7
      %p102 = por %p100, %p101
      %p103 = scmp.ne.s32.totalorder %s94, %s95
      %p104 = scmp.eq.s32.totalorder %s21, 0
      %p105 = por %p103, %p104
      %p106 = scmp.ne.s32.totalorder %s94, %s95
      %p107 = scmp.eq.s32.totalorder %s22, 7
      %p108 = por %p106, %p107
      %p110 = scmp.ne.s32.totalorder %s95, %s109
      %p111 = scmp.eq.s32.totalorder %s22, 0
      %p112 = por %p110, %p111
      %s113 = ssub.s32 %s16, %s23
      %p114 = scmp.eq.s32.totalorder %s113, 0
      %s116 = sadd.s32 %s115, 1
      %s117 = scalar_select %p114, %s115, %s116
      %p120 = pneg %p114
      %p121 = scmp.eq.s32.totalorder %s16, 7
      %p122 = por %p120, %p121
      %p123 = scmp.ne.s32.totalorder %s115, %s118
      %p124 = scmp.eq.s32.totalorder %s16, 0
      %p125 = por %p123, %p124
      %p126 = scmp.ne.s32.totalorder %s115, %s118
      %p127 = scmp.eq.s32.totalorder %s21, 7
      %p128 = por %p126, %p127
      %p129 = scmp.ne.s32.totalorder %s118, %s119
      %p130 = scmp.eq.s32.totalorder %s21, 0
      %p131 = por %p129, %p130
      %p132 = scmp.ne.s32.totalorder %s118, %s119
      %p133 = scmp.eq.s32.totalorder %s22, 7
      %p134 = por %p132, %p133
      %p136 = scmp.ne.s32.totalorder %s119, %s135
      %p137 = scmp.eq.s32.totalorder %s22, 0
      %p138 = por %p136, %p137
      %p139 = scmp.le.s32.totalorder 1, %s16
      %p140 = scmp.lt.s32.totalorder %s16, 9
      %p141 = pnand %p139, %p140
      %p142 = pneg %p141
      // Predicated region
      $region9: #{tpu_custom_call.1} parent=5 // pred_check
        _
      $region10: #{tpu_custom_call.1} parent=5 // pred_check_branch
        %144 = sbr.rel (%p141) target = $region12
      $region11: #{tpu_custom_call.1} parent=5 // pred_region
        %s145 = ssub.s32 %s16, 1
        // Predicated region
        $region13: #{tpu_custom_call.1} parent=11 // pred_check
          %p146 = pneg %p37
        $region14: #{tpu_custom_call.1} parent=11 // pred_check_branch
          %148 = sbr.rel (%p146) target = $region16
        $region15: #{tpu_custom_call.1} parent=11 // pred_region
          _
        $region16: #{tpu_custom_call.1} parent=11 // pred_fallthru
          _
        // Predicated region
        $region17: #{tpu_custom_call.1} parent=11 // pred_check
          %p149 = pneg %p84
        $region18: #{tpu_custom_call.1} parent=11 // pred_check_branch
          %151 = sbr.rel (%p149) target = $region20
        $region19: #{tpu_custom_call.1} parent=11 // pred_region
          _
        $region20: #{tpu_custom_call.1} parent=11 // pred_fallthru
          _
        // Predicated region
        $region21: #{tpu_custom_call.1} parent=11 // pred_check
          %p152 = pneg %p105
        $region22: #{tpu_custom_call.1} parent=11 // pred_check_branch
          %154 = sbr.rel (%p152) target = $region24
        $region23: #{tpu_custom_call.1} parent=11 // pred_region
          _
        $region24: #{tpu_custom_call.1} parent=11 // pred_fallthru
          _
      $region12: #{tpu_custom_call.1} parent=5 // pred_fallthru
        _
      %p155 = scmp.lt.s32.totalorder %s16, 8
      // Predicated region
      $region25: #{tpu_custom_call.1} parent=5 // pred_check
        %p156 = pneg %p155
      $region26: #{tpu_custom_call.1} parent=5 // pred_check_branch
        %158 = sbr.rel (%p156) target = $region28
      $region27: #{tpu_custom_call.1} parent=5 // pred_region
        // Predicated region
        $region29: #{tpu_custom_call.1} parent=27 // pred_check
          %p159 = pneg %p57
        $region30: #{tpu_custom_call.1} parent=27 // pred_check_branch
          %161 = sbr.rel (%p159) target = $region32
        $region31: #{tpu_custom_call.1} parent=27 // pred_region
          %s162 = sand.u32 %s47, 1
          %s163 = scalar_lea.sflag [#allocation3], %s162
          %s164 = sand.u32 %s47, 1
          %s165 = smul.addr %s164, 160
          %s166 = scalar_lea.vmem [#allocation2], %s165
          %s167 = smul.u32 4, %s16
          %s169 = ssub.s32 2560, 2560
          %170 = vsyncadd %s163, %s169
          %s171 = smul.addr %s167, 64
          %s172 = scalar_lea.hbm %s1, %s171
          %s173 = sshll.u32 %s166, 4
          %s174 = int_to_ptr.vmem [resolvable:$true] %s173
          %179 = dma.hbm_to_vmem [thread:$0]  %s172, 2560, %s174, %s163, 2048, 256, 16
        $region32: #{tpu_custom_call.1} parent=27 // pred_fallthru
          _
      $region28: #{tpu_custom_call.1} parent=5 // pred_fallthru
        _
      %p180 = scmp.le.s32.totalorder 1, %s16
      %p181 = scmp.lt.s32.totalorder %s16, 9
      %p182 = pnand %p180, %p181
      %p183 = pneg %p182
      // Predicated region
      $region33: #{tpu_custom_call.1} parent=5 // pred_check
        _
      $region34: #{tpu_custom_call.1} parent=5 // pred_check_branch
        %185 = sbr.rel (%p182) target = $region36
      $region35: #{tpu_custom_call.1} parent=5 // pred_region
        %s186 = ssub.s32 %s16, 1
        %s187 = sand.u32 %s50, 1
        %s188 = scalar_lea.sflag [#allocation3], %s187
        %s189 = sand.u32 %s50, 1
        %s190 = smul.addr %s189, 160
        %s191 = scalar_lea.vmem [#allocation2], %s190
        // Predicated region
        $region37: #{tpu_custom_call.1} parent=35 // pred_check
          %p192 = pneg %p63
        $region38: #{tpu_custom_call.1} parent=35 // pred_check_branch
          %194 = sbr.rel (%p192) target = $region40
        $region39: #{tpu_custom_call.1} parent=35 // pred_region
          %195 = dma.done %s188, 2560
        $region40: #{tpu_custom_call.1} parent=35 // pred_fallthru
          _
        %p196 = pneg %p37
        %p197 = pneg %p34
        %s198 = sand.u32 %s50, 1
        %s199 = scalar_lea.sflag [#allocation3], %s198
        %s200 = sand.u32 %s50, 1
        %s201 = smul.addr %s200, 160
        %s202 = scalar_lea.vmem [#allocation2], %s201
        %p203 = pneg %p63
        %p204 = pneg %p60
        %p205 = pneg %p84
        %p206 = pneg %p81
        %p207 = pneg %p105
        %p208 = pneg %p102
        %p209 = pneg %p131
        %p210 = pneg %p128
        %s211 = sand.u32 %s118, 1
        %s212 = scalar_lea.sflag [#allocation4], %s211
        %s213 = sand.u32 %s118, 1
        %s214 = smul.addr %s213, 16
        %s215 = scalar_lea.vmem [#allocation5], %s214
        %s216 = smul.u32 4, %s21
        %s217 = smul.u32 4, %s21
        %v219 = vld [vmem:[%s0] sm:$0xf]
        %v220 = vld [vmem:[%s191] sm:$0xff]
        %v221 = vld [vmem:[%s191 + $0x8] sm:$0xff]
        %v222 = vld [vmem:[%s191 + $0x10] sm:$0xff]
        %v223 = vld [vmem:[%s191 + $0x18] sm:$0xff]
        %v224 = vld [vmem:[%s191 + $0x20] sm:$0xff]
        %v225 = vld [vmem:[%s191 + $0x28] sm:$0xff]
        %v226 = vld [vmem:[%s191 + $0x30] sm:$0xff]
        %v227 = vld [vmem:[%s191 + $0x38] sm:$0xff]
        %v228 = vld [vmem:[%s191 + $0x40] sm:$0xff]
        %v229 = vld [vmem:[%s191 + $0x48] sm:$0xff]
        %v230 = vld [vmem:[%s191 + $0x50] sm:$0xff]
        %v231 = vld [vmem:[%s191 + $0x58] sm:$0xff]
        %v232 = vld [vmem:[%s191 + $0x60] sm:$0xff]
        %v233 = vld [vmem:[%s191 + $0x68] sm:$0xff]
        %v234 = vld [vmem:[%s191 + $0x70] sm:$0xff]
        %v235 = vld [vmem:[%s191 + $0x78] sm:$0xff]
        %v236 = vld [vmem:[%s191 + $0x80] sm:$0xff]
        %v237 = vld [vmem:[%s191 + $0x88] sm:$0xff]
        %v238 = vld [vmem:[%s191 + $0x90] sm:$0x33]
        %v239 = vld [vmem:[%s191 + $0x98] sm:$0x33]
        %v260 = vunpack.c.l.b16 %v220
        %v261 = vunpack.c.h.b16 %v220
        %v262 = vunpack.c.l.b16 %v221
        %v263 = vunpack.c.h.b16 %v221
        %v264 = vunpack.c.l.b16 %v222
        %v265 = vunpack.c.h.b16 %v222
        %v266 = vunpack.c.l.b16 %v223
        %v267 = vunpack.c.h.b16 %v223
        %v268 = vunpack.c.l.b16 %v224
        %v269 = vunpack.c.h.b16 %v224
        %v270 = vunpack.c.l.b16 %v225
        %v271 = vunpack.c.h.b16 %v225
        %v272 = vunpack.c.l.b16 %v226
        %v273 = vunpack.c.h.b16 %v226
        %v274 = vunpack.c.l.b16 %v227
        %v275 = vunpack.c.h.b16 %v227
        %v276 = vunpack.c.l.b16 %v228
        %v277 = vunpack.c.h.b16 %v228
        %v278 = vunpack.c.l.b16 %v229
        %v279 = vunpack.c.h.b16 %v229
        %v280 = vunpack.c.l.b16 %v230
        %v281 = vunpack.c.h.b16 %v230
        %v282 = vunpack.c.l.b16 %v231
        %v283 = vunpack.c.h.b16 %v231
        %v284 = vunpack.c.l.b16 %v232
        %v285 = vunpack.c.h.b16 %v232
        %v286 = vunpack.c.l.b16 %v233
        %v287 = vunpack.c.h.b16 %v233
        %v288 = vunpack.c.l.b16 %v234
        %v289 = vunpack.c.h.b16 %v234
        %v290 = vunpack.c.l.b16 %v235
        %v291 = vunpack.c.h.b16 %v235
        %v292 = vunpack.c.l.b16 %v236
        %v293 = vunpack.c.h.b16 %v236
        %v294 = vunpack.c.l.b16 %v237
        %v295 = vunpack.c.h.b16 %v237
        %v296 = vunpack.c.l.b16 %v238
        %v297 = vunpack.c.h.b16 %v238
        %v298 = vunpack.c.l.b16 %v239
        %v299 = vunpack.c.h.b16 %v239
        %v300 = vpack.c.b16 %v264, %v260
        %v301 = vpack.c.b16 %v265, %v261
        %v302 = vpack.c.b16 %v266, %v262
        %v303 = vpack.c.b16 %v267, %v263
        %v304 = vpack.c.b16 %v272, %v268
        %v305 = vpack.c.b16 %v273, %v269
        %v306 = vpack.c.b16 %v274, %v270
        %v307 = vpack.c.b16 %v275, %v271
        %v308 = vpack.c.b16 %v280, %v276
        %v309 = vpack.c.b16 %v281, %v277
        %v310 = vpack.c.b16 %v282, %v278
        %v311 = vpack.c.b16 %v283, %v279
        %v312 = vpack.c.b16 %v288, %v284
        %v313 = vpack.c.b16 %v289, %v285
        %v314 = vpack.c.b16 %v290, %v286
        %v315 = vpack.c.b16 %v291, %v287
        %v316 = vpack.c.b16 %v296, %v292
        %v317 = vpack.c.b16 %v297, %v293
        %v318 = vpack.c.b16 %v298, %v294
        %v319 = vpack.c.b16 %v299, %v295
        %vm336 = vcmask 613376
        %v338 = vsel %vm336, %v219, 0
        %vm340 = vcmask 1044480
        %vm341 = vcmask 1045504
        %v342 = vsel %vm340, 4294967295, 65535
        %v343 = vsel %vm341, %v342, 0
        %v345 = vand.u32 %v316, %v343
        %v348 = vand.u32 %v317, %v343
        %v351 = vand.u32 %v318, %v343
        %v354 = vand.u32 %v319, %v343
        %356 = vmatprep.subr.bf16.mxu0 0
        %357 = vmatpush1.bf16.msra.mxu0 0
        %358 = vmatprep.subr.bf16.mxu0 0
        %359 = vmatpush1.bf16.msra.mxu0 0
        %360 = vmatprep.subr.bf16.mxu0 0
        %361 = vmatpush1.bf16.msra.mxu0 0
        %362 = vmatprep.subr.bf16.mxu0 %v348
        %363 = vmatpush1.bf16.msra.mxu0 %v345
        %364 = vmatprep.subr.bf16.mxu0 %v313
        %365 = vmatpush1.bf16.msra.mxu0 %v312
        %366 = vmatprep.subr.bf16.mxu0 %v309
        %367 = vmatpush1.bf16.msra.mxu0 %v308
        %368 = vmatprep.subr.bf16.mxu0 %v305
        %369 = vmatpush1.bf16.msra.mxu0 %v304
        %370 = vmatprep.subr.bf16.mxu0 %v301
        %371 = vmatpush1.bf16.msra.mxu0 %v300
        %372 = vmatprep.subr.bf16.mxu0 0
        %373 = vmatpush2.bf16.msra.mxu0 0
        %374 = vmatprep.subr.bf16.mxu0 0
        %375 = vmatpush2.bf16.msra.mxu0 0
        %376 = vmatprep.subr.bf16.mxu0 0
        %377 = vmatpush2.bf16.msra.mxu0 0
        %378 = vmatprep.subr.bf16.mxu0 0
        %379 = vmatpush2.bf16.msra.mxu0 0
        %380 = vmatprep.subr.bf16.mxu0 0
        %381 = vmatpush2.bf16.msra.mxu0 0
        %382 = vmatprep.subr.bf16.mxu0 0
        %383 = vmatpush2.bf16.msra.mxu0 0
        %384 = vmatprep.subr.bf16.mxu0 0
        %385 = vmatpush2.bf16.msra.mxu0 0
        %386 = vmatprep.subr.bf16.mxu0 0
        %387 = vmatpush2.bf16.msra.mxu0 0
        %388 = vmatprep.mubr.bf16.mxu0 0
        %389 = vmatmul.mubr.bf16.gmra.mxu0 %v338
        %v390 = vpop.f32.mrf.mxu0
        %v391 = vadd.f32 0.0, %v390
        %v392 = vpop.f32.mrf.mxu0
        %v393 = vadd.f32 0.0, %v392
        %v394 = vpop.f32.mrf.mxu0
        %v395 = vpop.f32.mrf.mxu0
        %396 = vdwg.mxu0
        %397 = vmatprep.subr.bf16.mxu0 0
        %398 = vmatpush1.bf16.msra.mxu0 0
        %399 = vmatprep.subr.bf16.mxu0 0
        %400 = vmatpush1.bf16.msra.mxu0 0
        %401 = vmatprep.subr.bf16.mxu0 0
        %402 = vmatpush1.bf16.msra.mxu0 0
        %403 = vmatprep.subr.bf16.mxu0 %v354
        %404 = vmatpush1.bf16.msra.mxu0 %v351
        %405 = vmatprep.subr.bf16.mxu0 %v315
        %406 = vmatpush1.bf16.msra.mxu0 %v314
        %407 = vmatprep.subr.bf16.mxu0 %v311
        %408 = vmatpush1.bf16.msra.mxu0 %v310
        %409 = vmatprep.subr.bf16.mxu0 %v307
        %410 = vmatpush1.bf16.msra.mxu0 %v306
        %411 = vmatprep.subr.bf16.mxu0 %v303
        %412 = vmatpush1.bf16.msra.mxu0 %v302
        %413 = vmatprep.subr.bf16.mxu0 0
        %414 = vmatpush2.bf16.msra.mxu0 0
        %415 = vmatprep.subr.bf16.mxu0 0
        %416 = vmatpush2.bf16.msra.mxu0 0
        %417 = vmatprep.subr.bf16.mxu0 0
        %418 = vmatpush2.bf16.msra.mxu0 0
        %419 = vmatprep.subr.bf16.mxu0 0
        %420 = vmatpush2.bf16.msra.mxu0 0
        %421 = vmatprep.subr.bf16.mxu0 0
        %422 = vmatpush2.bf16.msra.mxu0 0
        %423 = vmatprep.subr.bf16.mxu0 0
        %424 = vmatpush2.bf16.msra.mxu0 0
        %425 = vmatprep.subr.bf16.mxu0 0
        %426 = vmatpush2.bf16.msra.mxu0 0
        %427 = vmatprep.subr.bf16.mxu0 0
        %428 = vmatpush2.bf16.msra.mxu0 0
        %429 = vmatprep.mubr.bf16.mxu0 0
        %430 = vmatmul.mubr.bf16.gmra.mxu0 %v338
        %v431 = vpop.f32.mrf.mxu0
        %v432 = vadd.f32 0.0, %v431
        %v433 = vpop.f32.mrf.mxu0
        %v434 = vadd.f32 0.0, %v433
        %v435 = vpop.f32.mrf.mxu0
        %v436 = vpop.f32.mrf.mxu0
        %437 = vdwg.mxu0
        %v438 = vld [vmem:[%s2] sm:$0xff]
        %440 = vset.pattern.permute.xlu0 0
        %441 = vperm.xlu0 %440, %v438
        %v442 = vpop.permute.xlu0 %441
        %v444 = vmul.f32 %v391, %v442
        %v445 = vmul.f32 %v393, %v442
        %v446 = vmul.f32 %v432, %v442
        %v447 = vmul.f32 %v434, %v442
        %v448 = vld [vmem:[%s3] sm:$0xff]
        %450 = vset.pattern.permute.xlu0 0
        %451 = vperm.xlu0 %450, %v448
        %v452 = vpop.permute.xlu0 %451
        %v454 = vadd.f32 %v444, %v452
        %v455 = vadd.f32 %v445, %v452
        %v456 = vadd.f32 %v446, %v452
        %v457 = vadd.f32 %v447, %v452
        %v458 = vmax.f32 %v454, 0.0
        %v459 = vmax.f32 %v455, 0.0
        %v460 = vmax.f32 %v456, 0.0
        %v461 = vmax.f32 %v457, 0.0
        %v462 = vpack.c.bf16 %v458, %v458
        %v463 = vpack.c.bf16 %v459, %v459
        %v464 = vpack.c.bf16 %v460, %v460
        %v465 = vpack.c.bf16 %v461, %v461
        %v470 = vunpack.c.l.b16 %v462
        %v471 = vunpack.c.l.b16 %v463
        %v472 = vunpack.c.l.b16 %v464
        %v473 = vunpack.c.l.b16 %v465
        %v474 = vpack.c.b16 %v471, %v470
        %v475 = vpack.c.b16 %v473, %v472
        %478 = vst [vmem:[%s215] sm:$0xff] %v474
        %479 = vst [vmem:[%s215 + $0x8] sm:$0xff] %v475
        %s480 = sand.u32 %s118, 1
        %s481 = scalar_lea.sflag [#allocation4], %s480
        %s482 = sand.u32 %s118, 1
        %s483 = smul.addr %s482, 16
        %s484 = scalar_lea.vmem [#allocation5], %s483
        // Predicated region
        $region41: #{tpu_custom_call.1} parent=35 // pred_check
          %p485 = pneg %p128
        $region42: #{tpu_custom_call.1} parent=35 // pred_check_branch
          %487 = sbr.rel (%p485) target = $region44
        $region43: #{tpu_custom_call.1} parent=35 // pred_region
          %s488 = smul.u32 4, %s21
          %s490 = ssub.s32 256, 256
          %491 = vsyncadd %s481, %s490
          %s492 = smul.addr %s488, 64
          %s493 = scalar_lea.hbm %s4, %s492
          %s495 = sshll.u32 %s484, 4
          %s496 = int_to_ptr.vmem [resolvable:$true] %s495
          %498 = dma.vmem_to_hbm [thread:$0]  %s496, 256, %s493, %s481
        $region44: #{tpu_custom_call.1} parent=35 // pred_fallthru
          _
      $region36: #{tpu_custom_call.1} parent=5 // pred_fallthru
        _
      %p499 = scmp.le.s32.totalorder 2, %s16
      // Predicated region
      $region45: #{tpu_custom_call.1} parent=5 // pred_check
        %p500 = pneg %p499
      $region46: #{tpu_custom_call.1} parent=5 // pred_check_branch
        %502 = sbr.rel (%p500) target = $region48
      $region47: #{tpu_custom_call.1} parent=5 // pred_region
        %s503 = ssub.s32 %s16, 2
        // Predicated region
        $region49: #{tpu_custom_call.1} parent=47 // pred_check
          %p504 = pneg %p134
        $region50: #{tpu_custom_call.1} parent=47 // pred_check_branch
          %506 = sbr.rel (%p504) target = $region52
        $region51: #{tpu_custom_call.1} parent=47 // pred_region
          %s507 = sand.u32 %s119, 1
          %s508 = scalar_lea.sflag [#allocation4], %s507
          %s509 = sand.u32 %s119, 1
          %s510 = smul.addr %s509, 16
          %s511 = scalar_lea.vmem [#allocation5], %s510
          %512 = dma.done %s508, 256
        $region52: #{tpu_custom_call.1} parent=47 // pred_fallthru
          _
      $region48: #{tpu_custom_call.1} parent=5 // pred_fallthru
        _
    $region6: #{tpu_custom_call.1} parent=1 // loop_footer
      %s20 = sadd.s32 1, %s16
    $region7: #{tpu_custom_call.1} parent=1 // loop_footer_branch
      %15 = sbr.rel target = $region3
    $region8: #{tpu_custom_call.1} parent=1 // loop_exit
      _
    %513 = vsyncpa [#allocation3], 1
    %s514 = scalar_lea.sflag [#allocation3], 1
    %515 = vsyncpa %s514, 1
    %516 = vsyncpa [#allocation4], 1
    %s517 = scalar_lea.sflag [#allocation4], 1
    %518 = vsyncpa %s517, 1

</llo_original>
